<compile_context>
chip_gen: v6e
topology: v6e:2x2x1
jax: 0.10.0
libtpu: 0.0.40
codegen_flags: <defaults>
</compile_context>

<pallas_src>
import functools

import jax
import jax.numpy as jnp
from jax.experimental import pallas as pl
from jax.experimental.pallas import tpu as pltpu

_BN_EPS = 1e-5


def _lka_kernel(
    x_ref,        # (Cin_p, L)   input activations, lane-dense
    masks_ref,    # (18, L)      rows 0..8: dilation-1 tap masks, 9..17: dilation-3
    dw1_w_ref,    # (Cin_p, 9)   depthwise-1 taps
    dw2_w_ref,    # (Cout_p, 9)  depthwise-2 (dilated) taps
    pw1_w_ref,    # (Cout_p, Cin_p)   BN-folded pointwise-1
    pw2_w_ref,    # (Cout_p, Cout_p)  BN-folded pointwise-2
    w3_ref,       # (Cout_p, Cout_p)  final 1x1 conv
    bias_ref,     # (Cout_p, 3)  columns: [pw1_b', pw2_b', b3]
    o_ref,        # (Cout_p, L)
    *, H: int, W: int, L: int):

    x = x_ref[...]
    masks = masks_ref[...]

    def depthwise3x3(h_in, wmat, dilation, mask_row0):
        # Cross-correlation: out[c,p] = sum_t w[c,t] * in[c, p + shift(t)]
        # implemented as one XLU roll + one precomputed-mask multiply per tap.
        # Center tap (t == 4) needs neither shift nor mask.
        acc = wmat[:, 4:5] * h_in
        for ky in range(3):
            for kx in range(3):
                t = ky * 3 + kx
                if t == 4:
                    continue
                oy = (ky - 1) * dilation
                ox = (kx - 1) * dilation
                s = oy * W + ox
                shifted = pltpu.roll(h_in, shift=(-s) % L, axis=1)
                m = masks[mask_row0 + t:mask_row0 + t + 1, :]     # (1, L)
                acc = acc + wmat[:, t:t + 1] * (shifted * m)
        return acc

    def pointwise_relu(h_in, w, b):
        # (C_out, C_in) @ (C_in, L) on the MXU; BN already folded into w, b.
        y = jnp.dot(w, h_in, preferred_element_type=jnp.float32) + b
        return jnp.maximum(y, 0.0)

    h = depthwise3x3(x, dw1_w_ref[...], dilation=1, mask_row0=0)
    h = pointwise_relu(h, pw1_w_ref[...], bias_ref[:, 0:1])
    h = depthwise3x3(h, dw2_w_ref[...], dilation=3, mask_row0=9)
    h = pointwise_relu(h, pw2_w_ref[...], bias_ref[:, 1:2])
    out = jnp.dot(w3_ref[...], h, preferred_element_type=jnp.float32)
    o_ref[...] = out + bias_ref[:, 2:3]               # lane-dense store


def _round_up(v, m):
    return ((v + m - 1) // m) * m


def lka_forward(x: jax.Array, p: dict) -> jax.Array:
    """x: (N, C_in, H, W) f32; p: PyTorch-layout parameters of the LKA module."""
    N, C_in, H, W = x.shape
    HW = H * W
    C_out = p["pw1_w"].shape[0]
    f32 = jnp.float32

    # Channel padding to the f32 sublane multiple (8).
    Cin_p = _round_up(max(C_in, 8), 8)
    Cout_p = _round_up(max(C_out, 8), 8)

    # Batch goes into the lane dim; split into 2 grid steps (megacore) when possible.
    n_steps = 2 if (N >= 2 and N % 2 == 0) else 1
    Nb = N // n_steps
    L = Nb * HW

    # ---- parameter prep: fold BN + depthwise bias into pointwise weights ----
    def bn_scale_shift(gamma, beta, mean, var):
        s = gamma.astype(f32) / jnp.sqrt(var.astype(f32) + _BN_EPS)
        t = beta.astype(f32) - mean.astype(f32) * s
        return s, t

    def pad2(a, rows, cols):
        return jnp.pad(a, ((0, rows - a.shape[0]), (0, cols - a.shape[1])))

    dw1_w = pad2(p["dw1_w"].astype(f32).reshape(C_in, 9), Cin_p, 9)
    dw2_w = pad2(p["dw2_w"].astype(f32).reshape(C_out, 9), Cout_p, 9)

    s1, t1 = bn_scale_shift(p["bn1_gamma"], p["bn1_beta"], p["bn1_mean"], p["bn1_var"])
    pw1_w_raw = p["pw1_w"].astype(f32).reshape(C_out, C_in)
    pw1_b = s1 * (p["pw1_b"].astype(f32)
                  + pw1_w_raw @ p["dw1_b"].astype(f32)) + t1
    pw1_w = pad2(s1[:, None] * pw1_w_raw, Cout_p, Cin_p)

    s2, t2 = bn_scale_shift(p["bn2_gamma"], p["bn2_beta"], p["bn2_mean"], p["bn2_var"])
    pw2_w_raw = p["pw2_w"].astype(f32).reshape(C_out, C_out)
    pw2_b = s2 * (p["pw2_b"].astype(f32)
                  + pw2_w_raw @ p["dw2_b"].astype(f32)) + t2
    pw2_w = pad2(s2[:, None] * pw2_w_raw, Cout_p, Cout_p)

    w3 = pad2(p["w3"].astype(f32).reshape(C_out, C_out), Cout_p, Cout_p)

    def pad_vec(v):
        return jnp.pad(v.astype(f32), (0, Cout_p - C_out))

    biases = jnp.stack(
        [pad_vec(pw1_b), pad_vec(pw2_b), pad_vec(p["b3"].astype(f32))], axis=1)

    # ---- precompute the 9-tap border masks per dilation (wrapper-side) ----
    hh = jnp.arange(HW, dtype=jnp.int32) // W
    ww = jnp.arange(HW, dtype=jnp.int32) % W

    def build_masks(d):
        rows = []
        for ky in range(3):
            for kx in range(3):
                oy = (ky - 1) * d
                ox = (kx - 1) * d
                valid = ((hh + oy >= 0) & (hh + oy < H)
                         & (ww + ox >= 0) & (ww + ox < W))
                rows.append(valid.astype(f32))
        return jnp.stack(rows, axis=0)                       # (9, HW)

    masks = jnp.concatenate([build_masks(1), build_masks(3)], axis=0)  # (18, HW)
    masks = jnp.tile(masks, (1, Nb))                                   # (18, L)

    # ---- activations: lane-dense (C, N*HW), channels zero-padded ----
    x_flat = x.astype(f32).reshape(N, C_in, HW)
    x_flat = jnp.transpose(x_flat, (1, 0, 2)).reshape(C_in, N * HW)
    x_flat = jnp.pad(x_flat, ((0, Cin_p - C_in), (0, 0)))

    # ---- specs ----
    x_spec = pl.BlockSpec((Cin_p, L), lambda n: (0, n))
    o_spec = pl.BlockSpec((Cout_p, L), lambda n: (0, n))

    def const(shape):
        return pl.BlockSpec(shape, lambda n: (0, 0))

    in_specs = [
        x_spec,
        const((18, L)),
        const((Cin_p, 9)),
        const((Cout_p, 9)),
        const((Cout_p, Cin_p)),
        const((Cout_p, Cout_p)),
        const((Cout_p, Cout_p)),
        const((Cout_p, 3)),
    ]

    # VMEM budget from the actual blocks: double-buffered in/out + weight tables
    # + headroom for the f32 intermediates inside the kernel.
    block_bytes = 4 * (Cin_p * L + 18 * L + Cin_p * 9 + Cout_p * 9
                       + Cout_p * Cin_p + 2 * Cout_p * Cout_p + 3 * Cout_p
                       + Cout_p * L)
    vmem_limit = int(min(120 * 1024 * 1024, max(4 * 1024 * 1024, 6 * block_bytes)))

    flops = 2 * N * HW * (C_in * 9 + C_out * C_in + C_out * 9 + 2 * C_out * C_out)
    bytes_accessed = 4 * (N * HW * (C_in + C_out) + 18 * L
                          + Cin_p * 9 + Cout_p * 9 + Cout_p * Cin_p
                          + 2 * Cout_p * Cout_p + 3 * Cout_p)

    kernel = functools.partial(_lka_kernel, H=H, W=W, L=L)

    out_flat = pl.pallas_call(
        kernel,
        out_shape=jax.ShapeDtypeStruct((Cout_p, N * HW), jnp.float32),
        grid=(n_steps,),
        in_specs=in_specs,
        out_specs=o_spec,
        compiler_params=pltpu.CompilerParams(
            dimension_semantics=("parallel",),
            vmem_limit_bytes=vmem_limit,
        ),
        cost_estimate=pl.CostEstimate(
            flops=flops, transcendentals=0, bytes_accessed=bytes_accessed),
    )(x_flat, masks, dw1_w, dw2_w, pw1_w, pw2_w, w3, biases)

    out = out_flat[:C_out].reshape(C_out, N, HW)
    return jnp.transpose(out, (1, 0, 2)).reshape(N, C_out, H, W)


def _reference(x, p):
    """Pure-JAX reference matching the PyTorch LKA forward (BN in eval mode)."""
    def dsconv(h, dw_w, dw_b, pw_w, pw_b, g, b, m, v, dilation, padding):
        C = h.shape[1]
        y = jax.lax.conv_general_dilated(
            h, dw_w, window_strides=(1, 1),
            padding=[(padding, padding), (padding, padding)],
            rhs_dilation=(dilation, dilation),
            dimension_numbers=("NCHW", "OIHW", "NCHW"),
            feature_group_count=C)
        y = y + dw_b[None, :, None, None]
        y = jax.lax.conv_general_dilated(
            y, pw_w, window_strides=(1, 1), padding="VALID",
            dimension_numbers=("NCHW", "OIHW", "NCHW"))
        y = y + pw_b[None, :, None, None]
        y = ((y - m[None, :, None, None])
             / jnp.sqrt(v[None, :, None, None] + _BN_EPS)
             * g[None, :, None, None] + b[None, :, None, None])
        return jnp.maximum(y, 0.0)

    h = dsconv(x, p["dw1_w"], p["dw1_b"], p["pw1_w"], p["pw1_b"],
               p["bn1_gamma"], p["bn1_beta"], p["bn1_mean"], p["bn1_var"], 1, 1)
    h = dsconv(h, p["dw2_w"], p["dw2_b"], p["pw2_w"], p["pw2_b"],
               p["bn2_gamma"], p["bn2_beta"], p["bn2_mean"], p["bn2_var"], 3, 3)
    y = jax.lax.conv_general_dilated(
        h, p["w3"], window_strides=(1, 1), padding="VALID",
        dimension_numbers=("NCHW", "OIHW", "NCHW"))
    return y + p["b3"][None, :, None, None]


if __name__ == "__main__":
    N, C_in, C_out, H, W = 2, 4, 8, 16, 16

    key = jax.random.PRNGKey(0)
    ks = jax.random.split(key, 19)

    def nrm(k, shape, scale=1.0):
        return scale * jax.random.normal(k, shape, dtype=jnp.float32)

    p = {
        "dw1_w": nrm(ks[0], (C_in, 1, 3, 3), 0.3),
        "dw1_b": nrm(ks[1], (C_in,), 0.1),
        "pw1_w": nrm(ks[2], (C_out, C_in, 1, 1), 0.3),
        "pw1_b": nrm(ks[3], (C_out,), 0.1),
        "bn1_gamma": 1.0 + 0.1 * jax.random.normal(ks[4], (C_out,), dtype=jnp.float32),
        "bn1_beta": nrm(ks[5], (C_out,), 0.1),
        "bn1_mean": nrm(ks[6], (C_out,), 0.1),
        "bn1_var": jax.random.uniform(ks[7], (C_out,), jnp.float32, 0.5, 1.5),
        "dw2_w": nrm(ks[8], (C_out, 1, 3, 3), 0.3),
        "dw2_b": nrm(ks[9], (C_out,), 0.1),
        "pw2_w": nrm(ks[10], (C_out, C_out, 1, 1), 0.3),
        "pw2_b": nrm(ks[11], (C_out,), 0.1),
        "bn2_gamma": 1.0 + 0.1 * jax.random.normal(ks[12], (C_out,), dtype=jnp.float32),
        "bn2_beta": nrm(ks[13], (C_out,), 0.1),
        "bn2_mean": nrm(ks[14], (C_out,), 0.1),
        "bn2_var": jax.random.uniform(ks[15], (C_out,), jnp.float32, 0.5, 1.5),
        "w3": nrm(ks[16], (C_out, C_out, 1, 1), 0.3),
        "b3": nrm(ks[17], (C_out,), 0.1),
    }
    x = nrm(ks[18], (N, C_in, H, W), 1.0)

    out = lka_forward(x, p)
    out = jax.block_until_ready(out)

    ref = _reference(x, p)
    assert out.shape == (N, C_out, H, W)
    max_err = float(jnp.max(jnp.abs(out - ref)))
    assert jnp.allclose(out, ref, atol=1e-4, rtol=1e-4), (
        f"mismatch vs reference, max abs err {max_err}")

    print("KERNEL_OK")
</pallas_src>

<mosaic_0001>
module attributes {stable_mosaic.version = 11 : i64} {
  func.func @_lka_kernel(%arg0: i32, %arg1: memref<8x256xf32, #tpu.memory_space<vmem>>, %arg2: memref<18x256xf32, #tpu.memory_space<vmem>>, %arg3: memref<8x9xf32, #tpu.memory_space<vmem>>, %arg4: memref<8x9xf32, #tpu.memory_space<vmem>>, %arg5: memref<8x8xf32, #tpu.memory_space<vmem>>, %arg6: memref<8x8xf32, #tpu.memory_space<vmem>>, %arg7: memref<8x8xf32, #tpu.memory_space<vmem>>, %arg8: memref<8x3xf32, #tpu.memory_space<vmem>>, %arg9: memref<8x256xf32, #tpu.memory_space<vmem>>) attributes {dimension_semantics = [#tpu.dimension_semantics<parallel>], iteration_bounds = array<i64: 2>, scalar_prefetch = 0 : i64, scratch_operands = 0 : i64, tpu.core_type = #tpu.core_type<tc>, window_params = [{transform_indices = @transform_0, window_bounds = array<i64: 8, 256>}, {pipeline_mode = #tpu.pipeline_mode<synchronous>, transform_indices = @transform_1, window_bounds = array<i64: 18, 256>}, {pipeline_mode = #tpu.pipeline_mode<synchronous>, transform_indices = @transform_2, window_bounds = array<i64: 8, 9>}, {pipeline_mode = #tpu.pipeline_mode<synchronous>, transform_indices = @transform_3, window_bounds = array<i64: 8, 9>}, {pipeline_mode = #tpu.pipeline_mode<synchronous>, transform_indices = @transform_4, window_bounds = array<i64: 8, 8>}, {pipeline_mode = #tpu.pipeline_mode<synchronous>, transform_indices = @transform_5, window_bounds = array<i64: 8, 8>}, {pipeline_mode = #tpu.pipeline_mode<synchronous>, transform_indices = @transform_6, window_bounds = array<i64: 8, 8>}, {pipeline_mode = #tpu.pipeline_mode<synchronous>, transform_indices = @transform_7, window_bounds = array<i64: 8, 3>}, {transform_indices = @transform_8, window_bounds = array<i64: 8, 256>}]} {
    %c0 = arith.constant 0 : index
    %c0_0 = arith.constant 0 : index
    %0 = vector.load %arg1[%c0, %c0_0] : memref<8x256xf32, #tpu.memory_space<vmem>>, vector<8x256xf32>
    %c0_1 = arith.constant 0 : index
    %c0_2 = arith.constant 0 : index
    %1 = vector.load %arg2[%c0_1, %c0_2] : memref<18x256xf32, #tpu.memory_space<vmem>>, vector<18x256xf32>
    %c0_3 = arith.constant 0 : index
    %c0_4 = arith.constant 0 : index
    %2 = vector.load %arg3[%c0_3, %c0_4] : memref<8x9xf32, #tpu.memory_space<vmem>>, vector<8x9xf32>
    %3 = vector.extract_strided_slice %2 {offsets = [0, 4], sizes = [8, 1], strides = [1, 1]} : vector<8x9xf32> to vector<8x1xf32>
    %4 = vector.broadcast %3 : vector<8x1xf32> to vector<8x256xf32>
    %5 = arith.mulf %4, %0 : vector<8x256xf32>
    %c17_i32 = arith.constant 17 : i32
    %6 = tpu.dynamic_rotate %0 by %c17_i32 dim 1 : vector<8x256xf32>, i32 -> vector<8x256xf32>
    %7 = vector.extract_strided_slice %1 {offsets = [0, 0], sizes = [1, 256], strides = [1, 1]} : vector<18x256xf32> to vector<1x256xf32>
    %8 = vector.extract_strided_slice %2 {offsets = [0, 0], sizes = [8, 1], strides = [1, 1]} : vector<8x9xf32> to vector<8x1xf32>
    %9 = vector.broadcast %7 : vector<1x256xf32> to vector<8x256xf32>
    %10 = arith.mulf %6, %9 : vector<8x256xf32>
    %11 = vector.broadcast %8 : vector<8x1xf32> to vector<8x256xf32>
    %12 = arith.mulf %11, %10 : vector<8x256xf32>
    %13 = arith.addf %5, %12 : vector<8x256xf32>
    %c16_i32 = arith.constant 16 : i32
    %14 = tpu.dynamic_rotate %0 by %c16_i32 dim 1 : vector<8x256xf32>, i32 -> vector<8x256xf32>
    %15 = vector.extract_strided_slice %1 {offsets = [1, 0], sizes = [1, 256], strides = [1, 1]} : vector<18x256xf32> to vector<1x256xf32>
    %16 = vector.extract_strided_slice %2 {offsets = [0, 1], sizes = [8, 1], strides = [1, 1]} : vector<8x9xf32> to vector<8x1xf32>
    %17 = vector.broadcast %15 : vector<1x256xf32> to vector<8x256xf32>
    %18 = arith.mulf %14, %17 : vector<8x256xf32>
    %19 = vector.broadcast %16 : vector<8x1xf32> to vector<8x256xf32>
    %20 = arith.mulf %19, %18 : vector<8x256xf32>
    %21 = arith.addf %13, %20 : vector<8x256xf32>
    %c15_i32 = arith.constant 15 : i32
    %22 = tpu.dynamic_rotate %0 by %c15_i32 dim 1 : vector<8x256xf32>, i32 -> vector<8x256xf32>
    %23 = vector.extract_strided_slice %1 {offsets = [2, 0], sizes = [1, 256], strides = [1, 1]} : vector<18x256xf32> to vector<1x256xf32>
    %24 = vector.extract_strided_slice %2 {offsets = [0, 2], sizes = [8, 1], strides = [1, 1]} : vector<8x9xf32> to vector<8x1xf32>
    %25 = vector.broadcast %23 : vector<1x256xf32> to vector<8x256xf32>
    %26 = arith.mulf %22, %25 : vector<8x256xf32>
    %27 = vector.broadcast %24 : vector<8x1xf32> to vector<8x256xf32>
    %28 = arith.mulf %27, %26 : vector<8x256xf32>
    %29 = arith.addf %21, %28 : vector<8x256xf32>
    %c1_i32 = arith.constant 1 : i32
    %30 = tpu.dynamic_rotate %0 by %c1_i32 dim 1 : vector<8x256xf32>, i32 -> vector<8x256xf32>
    %31 = vector.extract_strided_slice %1 {offsets = [3, 0], sizes = [1, 256], strides = [1, 1]} : vector<18x256xf32> to vector<1x256xf32>
    %32 = vector.extract_strided_slice %2 {offsets = [0, 3], sizes = [8, 1], strides = [1, 1]} : vector<8x9xf32> to vector<8x1xf32>
    %33 = vector.broadcast %31 : vector<1x256xf32> to vector<8x256xf32>
    %34 = arith.mulf %30, %33 : vector<8x256xf32>
    %35 = vector.broadcast %32 : vector<8x1xf32> to vector<8x256xf32>
    %36 = arith.mulf %35, %34 : vector<8x256xf32>
    %37 = arith.addf %29, %36 : vector<8x256xf32>
    %c255_i32 = arith.constant 255 : i32
    %38 = tpu.dynamic_rotate %0 by %c255_i32 dim 1 : vector<8x256xf32>, i32 -> vector<8x256xf32>
    %39 = vector.extract_strided_slice %1 {offsets = [5, 0], sizes = [1, 256], strides = [1, 1]} : vector<18x256xf32> to vector<1x256xf32>
    %40 = vector.extract_strided_slice %2 {offsets = [0, 5], sizes = [8, 1], strides = [1, 1]} : vector<8x9xf32> to vector<8x1xf32>
    %41 = vector.broadcast %39 : vector<1x256xf32> to vector<8x256xf32>
    %42 = arith.mulf %38, %41 : vector<8x256xf32>
    %43 = vector.broadcast %40 : vector<8x1xf32> to vector<8x256xf32>
    %44 = arith.mulf %43, %42 : vector<8x256xf32>
    %45 = arith.addf %37, %44 : vector<8x256xf32>
    %c241_i32 = arith.constant 241 : i32
    %46 = tpu.dynamic_rotate %0 by %c241_i32 dim 1 : vector<8x256xf32>, i32 -> vector<8x256xf32>
    %47 = vector.extract_strided_slice %1 {offsets = [6, 0], sizes = [1, 256], strides = [1, 1]} : vector<18x256xf32> to vector<1x256xf32>
    %48 = vector.extract_strided_slice %2 {offsets = [0, 6], sizes = [8, 1], strides = [1, 1]} : vector<8x9xf32> to vector<8x1xf32>
    %49 = vector.broadcast %47 : vector<1x256xf32> to vector<8x256xf32>
    %50 = arith.mulf %46, %49 : vector<8x256xf32>
    %51 = vector.broadcast %48 : vector<8x1xf32> to vector<8x256xf32>
    %52 = arith.mulf %51, %50 : vector<8x256xf32>
    %53 = arith.addf %45, %52 : vector<8x256xf32>
    %c240_i32 = arith.constant 240 : i32
    %54 = tpu.dynamic_rotate %0 by %c240_i32 dim 1 : vector<8x256xf32>, i32 -> vector<8x256xf32>
    %55 = vector.extract_strided_slice %1 {offsets = [7, 0], sizes = [1, 256], strides = [1, 1]} : vector<18x256xf32> to vector<1x256xf32>
    %56 = vector.extract_strided_slice %2 {offsets = [0, 7], sizes = [8, 1], strides = [1, 1]} : vector<8x9xf32> to vector<8x1xf32>
    %57 = vector.broadcast %55 : vector<1x256xf32> to vector<8x256xf32>
    %58 = arith.mulf %54, %57 : vector<8x256xf32>
    %59 = vector.broadcast %56 : vector<8x1xf32> to vector<8x256xf32>
    %60 = arith.mulf %59, %58 : vector<8x256xf32>
    %61 = arith.addf %53, %60 : vector<8x256xf32>
    %c239_i32 = arith.constant 239 : i32
    %62 = tpu.dynamic_rotate %0 by %c239_i32 dim 1 : vector<8x256xf32>, i32 -> vector<8x256xf32>
    %63 = vector.extract_strided_slice %1 {offsets = [8, 0], sizes = [1, 256], strides = [1, 1]} : vector<18x256xf32> to vector<1x256xf32>
    %64 = vector.extract_strided_slice %2 {offsets = [0, 8], sizes = [8, 1], strides = [1, 1]} : vector<8x9xf32> to vector<8x1xf32>
    %65 = vector.broadcast %63 : vector<1x256xf32> to vector<8x256xf32>
    %66 = arith.mulf %62, %65 : vector<8x256xf32>
    %67 = vector.broadcast %64 : vector<8x1xf32> to vector<8x256xf32>
    %68 = arith.mulf %67, %66 : vector<8x256xf32>
    %69 = arith.addf %61, %68 : vector<8x256xf32>
    %c0_5 = arith.constant 0 : index
    %c0_6 = arith.constant 0 : index
    %70 = vector.load %arg5[%c0_5, %c0_6] : memref<8x8xf32, #tpu.memory_space<vmem>>, vector<8x8xf32>
    %c0_7 = arith.constant 0 : index
    %c0_8 = arith.constant 0 : index
    %71 = vector.load %arg8[%c0_7, %c0_8] : memref<8x3xf32, #tpu.memory_space<vmem>>, vector<8x1xf32>
    %cst = arith.constant dense<0.000000e+00> : vector<8x256xf32>
    %72 = tpu.matmul %70, %69, %cst {dimension_numbers = #tpu.dot_dimension_numbers<[1], [0], [0], [1], [0, 0, 1, 1], [], []>} : vector<8x8xf32>, vector<8x256xf32>, vector<8x256xf32> -> vector<8x256xf32>
    %73 = vector.broadcast %71 : vector<8x1xf32> to vector<8x256xf32>
    %74 = arith.addf %72, %73 : vector<8x256xf32>
    %cst_9 = arith.constant 0.000000e+00 : f32
    %75 = vector.broadcast %cst_9 : f32 to vector<8x256xf32>
    %76 = arith.maximumf %74, %75 : vector<8x256xf32>
    %c0_10 = arith.constant 0 : index
    %c0_11 = arith.constant 0 : index
    %77 = vector.load %arg4[%c0_10, %c0_11] : memref<8x9xf32, #tpu.memory_space<vmem>>, vector<8x9xf32>
    %78 = vector.extract_strided_slice %77 {offsets = [0, 4], sizes = [8, 1], strides = [1, 1]} : vector<8x9xf32> to vector<8x1xf32>
    %79 = vector.broadcast %78 : vector<8x1xf32> to vector<8x256xf32>
    %80 = arith.mulf %79, %76 : vector<8x256xf32>
    %c51_i32 = arith.constant 51 : i32
    %81 = tpu.dynamic_rotate %76 by %c51_i32 dim 1 : vector<8x256xf32>, i32 -> vector<8x256xf32>
    %82 = vector.extract_strided_slice %1 {offsets = [9, 0], sizes = [1, 256], strides = [1, 1]} : vector<18x256xf32> to vector<1x256xf32>
    %83 = vector.extract_strided_slice %77 {offsets = [0, 0], sizes = [8, 1], strides = [1, 1]} : vector<8x9xf32> to vector<8x1xf32>
    %84 = vector.broadcast %82 : vector<1x256xf32> to vector<8x256xf32>
    %85 = arith.mulf %81, %84 : vector<8x256xf32>
    %86 = vector.broadcast %83 : vector<8x1xf32> to vector<8x256xf32>
    %87 = arith.mulf %86, %85 : vector<8x256xf32>
    %88 = arith.addf %80, %87 : vector<8x256xf32>
    %c48_i32 = arith.constant 48 : i32
    %89 = tpu.dynamic_rotate %76 by %c48_i32 dim 1 : vector<8x256xf32>, i32 -> vector<8x256xf32>
    %90 = vector.extract_strided_slice %1 {offsets = [10, 0], sizes = [1, 256], strides = [1, 1]} : vector<18x256xf32> to vector<1x256xf32>
    %91 = vector.extract_strided_slice %77 {offsets = [0, 1], sizes = [8, 1], strides = [1, 1]} : vector<8x9xf32> to vector<8x1xf32>
    %92 = vector.broadcast %90 : vector<1x256xf32> to vector<8x256xf32>
    %93 = arith.mulf %89, %92 : vector<8x256xf32>
    %94 = vector.broadcast %91 : vector<8x1xf32> to vector<8x256xf32>
    %95 = arith.mulf %94, %93 : vector<8x256xf32>
    %96 = arith.addf %88, %95 : vector<8x256xf32>
    %c45_i32 = arith.constant 45 : i32
    %97 = tpu.dynamic_rotate %76 by %c45_i32 dim 1 : vector<8x256xf32>, i32 -> vector<8x256xf32>
    %98 = vector.extract_strided_slice %1 {offsets = [11, 0], sizes = [1, 256], strides = [1, 1]} : vector<18x256xf32> to vector<1x256xf32>
    %99 = vector.extract_strided_slice %77 {offsets = [0, 2], sizes = [8, 1], strides = [1, 1]} : vector<8x9xf32> to vector<8x1xf32>
    %100 = vector.broadcast %98 : vector<1x256xf32> to vector<8x256xf32>
    %101 = arith.mulf %97, %100 : vector<8x256xf32>
    %102 = vector.broadcast %99 : vector<8x1xf32> to vector<8x256xf32>
    %103 = arith.mulf %102, %101 : vector<8x256xf32>
    %104 = arith.addf %96, %103 : vector<8x256xf32>
    %c3_i32 = arith.constant 3 : i32
    %105 = tpu.dynamic_rotate %76 by %c3_i32 dim 1 : vector<8x256xf32>, i32 -> vector<8x256xf32>
    %106 = vector.extract_strided_slice %1 {offsets = [12, 0], sizes = [1, 256], strides = [1, 1]} : vector<18x256xf32> to vector<1x256xf32>
    %107 = vector.extract_strided_slice %77 {offsets = [0, 3], sizes = [8, 1], strides = [1, 1]} : vector<8x9xf32> to vector<8x1xf32>
    %108 = vector.broadcast %106 : vector<1x256xf32> to vector<8x256xf32>
    %109 = arith.mulf %105, %108 : vector<8x256xf32>
    %110 = vector.broadcast %107 : vector<8x1xf32> to vector<8x256xf32>
    %111 = arith.mulf %110, %109 : vector<8x256xf32>
    %112 = arith.addf %104, %111 : vector<8x256xf32>
    %c253_i32 = arith.constant 253 : i32
    %113 = tpu.dynamic_rotate %76 by %c253_i32 dim 1 : vector<8x256xf32>, i32 -> vector<8x256xf32>
    %114 = vector.extract_strided_slice %1 {offsets = [14, 0], sizes = [1, 256], strides = [1, 1]} : vector<18x256xf32> to vector<1x256xf32>
    %115 = vector.extract_strided_slice %77 {offsets = [0, 5], sizes = [8, 1], strides = [1, 1]} : vector<8x9xf32> to vector<8x1xf32>
    %116 = vector.broadcast %114 : vector<1x256xf32> to vector<8x256xf32>
    %117 = arith.mulf %113, %116 : vector<8x256xf32>
    %118 = vector.broadcast %115 : vector<8x1xf32> to vector<8x256xf32>
    %119 = arith.mulf %118, %117 : vector<8x256xf32>
    %120 = arith.addf %112, %119 : vector<8x256xf32>
    %c211_i32 = arith.constant 211 : i32
    %121 = tpu.dynamic_rotate %76 by %c211_i32 dim 1 : vector<8x256xf32>, i32 -> vector<8x256xf32>
    %122 = vector.extract_strided_slice %1 {offsets = [15, 0], sizes = [1, 256], strides = [1, 1]} : vector<18x256xf32> to vector<1x256xf32>
    %123 = vector.extract_strided_slice %77 {offsets = [0, 6], sizes = [8, 1], strides = [1, 1]} : vector<8x9xf32> to vector<8x1xf32>
    %124 = vector.broadcast %122 : vector<1x256xf32> to vector<8x256xf32>
    %125 = arith.mulf %121, %124 : vector<8x256xf32>
    %126 = vector.broadcast %123 : vector<8x1xf32> to vector<8x256xf32>
    %127 = arith.mulf %126, %125 : vector<8x256xf32>
    %128 = arith.addf %120, %127 : vector<8x256xf32>
    %c208_i32 = arith.constant 208 : i32
    %129 = tpu.dynamic_rotate %76 by %c208_i32 dim 1 : vector<8x256xf32>, i32 -> vector<8x256xf32>
    %130 = vector.extract_strided_slice %1 {offsets = [16, 0], sizes = [1, 256], strides = [1, 1]} : vector<18x256xf32> to vector<1x256xf32>
    %131 = vector.extract_strided_slice %77 {offsets = [0, 7], sizes = [8, 1], strides = [1, 1]} : vector<8x9xf32> to vector<8x1xf32>
    %132 = vector.broadcast %130 : vector<1x256xf32> to vector<8x256xf32>
    %133 = arith.mulf %129, %132 : vector<8x256xf32>
    %134 = vector.broadcast %131 : vector<8x1xf32> to vector<8x256xf32>
    %135 = arith.mulf %134, %133 : vector<8x256xf32>
    %136 = arith.addf %128, %135 : vector<8x256xf32>
    %c205_i32 = arith.constant 205 : i32
    %137 = tpu.dynamic_rotate %76 by %c205_i32 dim 1 : vector<8x256xf32>, i32 -> vector<8x256xf32>
    %138 = vector.extract_strided_slice %1 {offsets = [17, 0], sizes = [1, 256], strides = [1, 1]} : vector<18x256xf32> to vector<1x256xf32>
    %139 = vector.extract_strided_slice %77 {offsets = [0, 8], sizes = [8, 1], strides = [1, 1]} : vector<8x9xf32> to vector<8x1xf32>
    %140 = vector.broadcast %138 : vector<1x256xf32> to vector<8x256xf32>
    %141 = arith.mulf %137, %140 : vector<8x256xf32>
    %142 = vector.broadcast %139 : vector<8x1xf32> to vector<8x256xf32>
    %143 = arith.mulf %142, %141 : vector<8x256xf32>
    %144 = arith.addf %136, %143 : vector<8x256xf32>
    %c0_12 = arith.constant 0 : index
    %c0_13 = arith.constant 0 : index
    %145 = vector.load %arg6[%c0_12, %c0_13] : memref<8x8xf32, #tpu.memory_space<vmem>>, vector<8x8xf32>
    %c0_14 = arith.constant 0 : index
    %c1 = arith.constant 1 : index
    %146 = vector.load %arg8[%c0_14, %c1] : memref<8x3xf32, #tpu.memory_space<vmem>>, vector<8x1xf32>
    %cst_15 = arith.constant dense<0.000000e+00> : vector<8x256xf32>
    %147 = tpu.matmul %145, %144, %cst_15 {dimension_numbers = #tpu.dot_dimension_numbers<[1], [0], [0], [1], [0, 0, 1, 1], [], []>} : vector<8x8xf32>, vector<8x256xf32>, vector<8x256xf32> -> vector<8x256xf32>
    %148 = vector.broadcast %146 : vector<8x1xf32> to vector<8x256xf32>
    %149 = arith.addf %147, %148 : vector<8x256xf32>
    %cst_16 = arith.constant 0.000000e+00 : f32
    %150 = vector.broadcast %cst_16 : f32 to vector<8x256xf32>
    %151 = arith.maximumf %149, %150 : vector<8x256xf32>
    %c0_17 = arith.constant 0 : index
    %c0_18 = arith.constant 0 : index
    %152 = vector.load %arg7[%c0_17, %c0_18] : memref<8x8xf32, #tpu.memory_space<vmem>>, vector<8x8xf32>
    %cst_19 = arith.constant dense<0.000000e+00> : vector<8x256xf32>
    %153 = tpu.matmul %152, %151, %cst_19 {dimension_numbers = #tpu.dot_dimension_numbers<[1], [0], [0], [1], [0, 0, 1, 1], [], []>} : vector<8x8xf32>, vector<8x256xf32>, vector<8x256xf32> -> vector<8x256xf32>
    %c0_20 = arith.constant 0 : index
    %c2 = arith.constant 2 : index
    %154 = vector.load %arg8[%c0_20, %c2] : memref<8x3xf32, #tpu.memory_space<vmem>>, vector<8x1xf32>
    %155 = vector.broadcast %154 : vector<8x1xf32> to vector<8x256xf32>
    %156 = arith.addf %153, %155 : vector<8x256xf32>
    %c0_21 = arith.constant 0 : index
    %c0_22 = arith.constant 0 : index
    %157 = vector.load %arg9[%c0_21, %c0_22] : memref<8x256xf32, #tpu.memory_space<vmem>>, vector<8x256xf32>
    tpu.vector_store %arg9[%c0_21, %c0_22], %156 {strides = array<i32>} : memref<8x256xf32, #tpu.memory_space<vmem>>, vector<8x256xf32>,
    return
  }
  func.func @transform_0(%arg0: i32) -> (i32, i32) {
    %c0_i32 = arith.constant 0 : i32
    %c0_i32_0 = arith.constant 0 : i32
    return %c0_i32, %arg0 : i32, i32
  }
  func.func @transform_1(%arg0: i32) -> (i32, i32) {
    %c0_i32 = arith.constant 0 : i32
    %c0_i32_0 = arith.constant 0 : i32
    %c0_i32_1 = arith.constant 0 : i32
    return %c0_i32, %c0_i32_0 : i32, i32
  }
  func.func @transform_2(%arg0: i32) -> (i32, i32) {
    %c0_i32 = arith.constant 0 : i32
    %c0_i32_0 = arith.constant 0 : i32
    %c0_i32_1 = arith.constant 0 : i32
    return %c0_i32, %c0_i32_0 : i32, i32
  }
  func.func @transform_3(%arg0: i32) -> (i32, i32) {
    %c0_i32 = arith.constant 0 : i32
    %c0_i32_0 = arith.constant 0 : i32
    %c0_i32_1 = arith.constant 0 : i32
    return %c0_i32, %c0_i32_0 : i32, i32
  }
  func.func @transform_4(%arg0: i32) -> (i32, i32) {
    %c0_i32 = arith.constant 0 : i32
    %c0_i32_0 = arith.constant 0 : i32
    %c0_i32_1 = arith.constant 0 : i32
    return %c0_i32, %c0_i32_0 : i32, i32
  }
  func.func @transform_5(%arg0: i32) -> (i32, i32) {
    %c0_i32 = arith.constant 0 : i32
    %c0_i32_0 = arith.constant 0 : i32
    %c0_i32_1 = arith.constant 0 : i32
    return %c0_i32, %c0_i32_0 : i32, i32
  }
  func.func @transform_6(%arg0: i32) -> (i32, i32) {
    %c0_i32 = arith.constant 0 : i32
    %c0_i32_0 = arith.constant 0 : i32
    %c0_i32_1 = arith.constant 0 : i32
    return %c0_i32, %c0_i32_0 : i32, i32
  }
  func.func @transform_7(%arg0: i32) -> (i32, i32) {
    %c0_i32 = arith.constant 0 : i32
    %c0_i32_0 = arith.constant 0 : i32
    %c0_i32_1 = arith.constant 0 : i32
    return %c0_i32, %c0_i32_0 : i32, i32
  }
  func.func @transform_8(%arg0: i32) -> (i32, i32) {
    %c0_i32 = arith.constant 0 : i32
    %c0_i32_0 = arith.constant 0 : i32
    return %c0_i32, %arg0 : i32, i32
  }
}

</mosaic_0001>

<llo_original>
// kernel: tpu_custom_call.1
$region0: #{tpu_custom_call.1}
  #allocation0 [shape = 'u32[]', space=smem, size = 0x4, offset = 0x4, fixed_abs, tag = 'smem constant byte address 0x4 - core index']
  #allocation1 [shape = 'u32[144,128]{1,0:T(1,128)}', space=vmem, size = 0x12000, scoped, tag = 'internal scratch']
  %s0 = inlined_call_operand.hbm [shape: f32[8,512], index: 0, kind: input, shape index: {}]
  %s1 = inlined_call_operand.hbm [shape: f32[18,256], index: 1, kind: input, shape index: {}]
  %s2 = inlined_call_operand.vmem [shape: f32[8,9], index: 2, kind: input, shape index: {}]
  %s3 = inlined_call_operand.vmem [shape: f32[8,9], index: 3, kind: input, shape index: {}]
  %s4 = inlined_call_operand.hbm [shape: f32[8,8], index: 4, kind: input, shape index: {}]
  %s5 = inlined_call_operand.hbm [shape: f32[8,8], index: 5, kind: input, shape index: {}]
  %s6 = inlined_call_operand.hbm [shape: f32[8,8], index: 6, kind: input, shape index: {}]
  %s7 = inlined_call_operand.vmem [shape: f32[8,3], index: 7, kind: input, shape index: {}]
  %s8 = inlined_call_operand.hbm [shape: f32[8,512], index: 8, kind: output, shape index: {}]
  %s9 = sld [smem:[#allocation0]]
  $region85: #{tpu_custom_call.1} parent=0
    _
  %s11 = ssub.s32 1, %s9
  %s12 = scalar_select 0, %s11, %s9
  $region1: #{tpu_custom_call.1} parent=0
    #allocation2 [shape = 'u8[16384]{0}', space=vmem, size = 0x4000, scoped, tag = 'input window, operand 0']
    #allocation3 [shape = 's32[2]{0}', space=sflag, size = 0x8, scoped, tag = 'scoped memory for tpu_custom_call.1']
    #allocation4 [shape = 's32[2]{0}', space=sflag, size = 0x8, scoped, tag = 'scoped memory for tpu_custom_call.1']
    #allocation5 [shape = 'u8[24576]{0}', space=vmem, size = 0x6000, scoped, tag = 'input window, operand 1, single buffered']
    #allocation6 [shape = 's32[1]{0}', space=sflag, size = 0x4, scoped, tag = 'scoped memory for tpu_custom_call.1']
    #allocation7 [shape = 'u8[4096]{0}', space=vmem, size = 0x1000, scoped, tag = 'input window, operand 4, single buffered']
    #allocation8 [shape = 'u8[4096]{0}', space=vmem, size = 0x1000, scoped, tag = 'input window, operand 5, single buffered']
    #allocation9 [shape = 's32[1]{0}', space=sflag, size = 0x4, scoped, tag = 'scoped memory for tpu_custom_call.1']
    #allocation10 [shape = 'u8[4096]{0}', space=vmem, size = 0x1000, scoped, tag = 'input window, operand 6, single buffered']
    #allocation11 [shape = 'u8[16384]{0}', space=vmem, size = 0x4000, scoped, tag = 'output window, operand 0']
    %13 = vsyncpa [#allocation3], 0
    %s14 = scalar_lea.sflag [#allocation3], 1
    %15 = vsyncpa %s14, 0
    %16 = vsyncpa [#allocation6], 0
    %17 = vsyncpa [#allocation9], 0
    %18 = vsyncpa [#allocation4], 0
    %s19 = scalar_lea.sflag [#allocation4], 1
    %20 = vsyncpa %s19, 0
    loop: start=0, step=1, limit=4
    $region2: #{tpu_custom_call.1} parent=1 // loop_pre_header
      _
    $region3: #{tpu_custom_call.1} parent=1 // loop_header
      %s22 = sphi 0, %s26
      %p23 = scmp.ge.s32.totalorder %s22, 4
      %s32 = sphi 0, %s34
      %s35 = sphi 0, %s32
      %s36 = sphi 0, %s35
      %s52 = sphi 0, %s36
      %s56 = sphi 0, %s56
      %s58 = sphi 0, %s56
      %s59 = sphi 0, %s58
      %s73 = sphi 0, %s59
      %s77 = sphi 0, %s77
      %s79 = sphi 0, %s77
      %s80 = sphi 0, %s79
      %s94 = sphi 0, %s80
      %s98 = sphi 0, %s98
      %s100 = sphi 0, %s98
      %s101 = sphi 0, %s100
      %s115 = sphi 0, %s101
      %s119 = sphi 0, %s119
      %s121 = sphi 0, %s119
      %s122 = sphi 0, %s121
      %s136 = sphi 0, %s122
      %s140 = sphi 0, %s140
      %s142 = sphi 0, %s140
      %s143 = sphi 0, %s142
      %s157 = sphi 0, %s143
      %s161 = sphi 0, %s161
      %s163 = sphi 0, %s161
      %s164 = sphi 0, %s163
      %s178 = sphi 0, %s164
      %s182 = sphi 0, %s182
      %s184 = sphi 0, %s182
      %s185 = sphi 0, %s184
      %s199 = sphi 0, %s185
      %s205 = sphi 0, %s207
      %s208 = sphi 0, %s205
      %s209 = sphi 0, %s208
      %s225 = sphi 0, %s209
    $region4: #{tpu_custom_call.1} parent=1 // loop_header_branch
      %25 = sbr.rel (%p23) target = $region8
    $region5: #{tpu_custom_call.1} parent=1 // loop_body
      %s27 = ssub.s32 %s22, 1
      %s28 = ssub.s32 %s22, 2
      %s29 = sadd.s32 %s22, 1
      %s30 = ssub.s32 %s22, %s29
      %p31 = scmp.eq.s32.totalorder %s30, 0
      %s33 = sadd.s32 %s32, 1
      %s34 = scalar_select %p31, %s32, %s33
      %p37 = pneg %p31
      %p38 = scmp.eq.s32.totalorder %s22, 1
      %p39 = por %p37, %p38
      %p40 = scmp.ne.s32.totalorder %s32, %s35
      %p41 = scmp.eq.s32.totalorder %s22, 0
      %p42 = por %p40, %p41
      %p43 = scmp.ne.s32.totalorder %s32, %s35
      %p44 = scmp.eq.s32.totalorder %s27, 1
      %p45 = por %p43, %p44
      %p46 = scmp.ne.s32.totalorder %s35, %s36
      %p47 = scmp.eq.s32.totalorder %s27, 0
      %p48 = por %p46, %p47
      %p49 = scmp.ne.s32.totalorder %s35, %s36
      %p50 = scmp.eq.s32.totalorder %s28, 1
      %p51 = por %p49, %p50
      %p53 = scmp.ne.s32.totalorder %s36, %s52
      %p54 = scmp.eq.s32.totalorder %s28, 0
      %p55 = por %p53, %p54
      %s57 = sadd.s32 %s56, 1
      %p60 = scmp.eq.s32.totalorder %s22, 1
      %p61 = scmp.ne.s32.totalorder %s56, %s58
      %p62 = scmp.eq.s32.totalorder %s22, 0
      %p63 = por %p61, %p62
      %p64 = scmp.ne.s32.totalorder %s56, %s58
      %p65 = scmp.eq.s32.totalorder %s27, 1
      %p66 = por %p64, %p65
      %p67 = scmp.ne.s32.totalorder %s58, %s59
      %p68 = scmp.eq.s32.totalorder %s27, 0
      %p69 = por %p67, %p68
      %p70 = scmp.ne.s32.totalorder %s58, %s59
      %p71 = scmp.eq.s32.totalorder %s28, 1
      %p72 = por %p70, %p71
      %p74 = scmp.ne.s32.totalorder %s59, %s73
      %p75 = scmp.eq.s32.totalorder %s28, 0
      %p76 = por %p74, %p75
      %s78 = sadd.s32 %s77, 1
      %p81 = scmp.eq.s32.totalorder %s22, 1
      %p82 = scmp.ne.s32.totalorder %s77, %s79
      %p83 = scmp.eq.s32.totalorder %s22, 0
      %p84 = por %p82, %p83
      %p85 = scmp.ne.s32.totalorder %s77, %s79
      %p86 = scmp.eq.s32.totalorder %s27, 1
      %p87 = por %p85, %p86
      %p88 = scmp.ne.s32.totalorder %s79, %s80
      %p89 = scmp.eq.s32.totalorder %s27, 0
      %p90 = por %p88, %p89
      %p91 = scmp.ne.s32.totalorder %s79, %s80
      %p92 = scmp.eq.s32.totalorder %s28, 1
      %p93 = por %p91, %p92
      %p95 = scmp.ne.s32.totalorder %s80, %s94
      %p96 = scmp.eq.s32.totalorder %s28, 0
      %p97 = por %p95, %p96
      %s99 = sadd.s32 %s98, 1
      %p102 = scmp.eq.s32.totalorder %s22, 1
      %p103 = scmp.ne.s32.totalorder %s98, %s100
      %p104 = scmp.eq.s32.totalorder %s22, 0
      %p105 = por %p103, %p104
      %p106 = scmp.ne.s32.totalorder %s98, %s100
      %p107 = scmp.eq.s32.totalorder %s27, 1
      %p108 = por %p106, %p107
      %p109 = scmp.ne.s32.totalorder %s100, %s101
      %p110 = scmp.eq.s32.totalorder %s27, 0
      %p111 = por %p109, %p110
      %p112 = scmp.ne.s32.totalorder %s100, %s101
      %p113 = scmp.eq.s32.totalorder %s28, 1
      %p114 = por %p112, %p113
      %p116 = scmp.ne.s32.totalorder %s101, %s115
      %p117 = scmp.eq.s32.totalorder %s28, 0
      %p118 = por %p116, %p117
      %s120 = sadd.s32 %s119, 1
      %p123 = scmp.eq.s32.totalorder %s22, 1
      %p124 = scmp.ne.s32.totalorder %s119, %s121
      %p125 = scmp.eq.s32.totalorder %s22, 0
      %p126 = por %p124, %p125
      %p127 = scmp.ne.s32.totalorder %s119, %s121
      %p128 = scmp.eq.s32.totalorder %s27, 1
      %p129 = por %p127, %p128
      %p130 = scmp.ne.s32.totalorder %s121, %s122
      %p131 = scmp.eq.s32.totalorder %s27, 0
      %p132 = por %p130, %p131
      %p133 = scmp.ne.s32.totalorder %s121, %s122
      %p134 = scmp.eq.s32.totalorder %s28, 1
      %p135 = por %p133, %p134
      %p137 = scmp.ne.s32.totalorder %s122, %s136
      %p138 = scmp.eq.s32.totalorder %s28, 0
      %p139 = por %p137, %p138
      %s141 = sadd.s32 %s140, 1
      %p144 = scmp.eq.s32.totalorder %s22, 1
      %p145 = scmp.ne.s32.totalorder %s140, %s142
      %p146 = scmp.eq.s32.totalorder %s22, 0
      %p147 = por %p145, %p146
      %p148 = scmp.ne.s32.totalorder %s140, %s142
      %p149 = scmp.eq.s32.totalorder %s27, 1
      %p150 = por %p148, %p149
      %p151 = scmp.ne.s32.totalorder %s142, %s143
      %p152 = scmp.eq.s32.totalorder %s27, 0
      %p153 = por %p151, %p152
      %p154 = scmp.ne.s32.totalorder %s142, %s143
      %p155 = scmp.eq.s32.totalorder %s28, 1
      %p156 = por %p154, %p155
      %p158 = scmp.ne.s32.totalorder %s143, %s157
      %p159 = scmp.eq.s32.totalorder %s28, 0
      %p160 = por %p158, %p159
      %s162 = sadd.s32 %s161, 1
      %p165 = scmp.eq.s32.totalorder %s22, 1
      %p166 = scmp.ne.s32.totalorder %s161, %s163
      %p167 = scmp.eq.s32.totalorder %s22, 0
      %p168 = por %p166, %p167
      %p169 = scmp.ne.s32.totalorder %s161, %s163
      %p170 = scmp.eq.s32.totalorder %s27, 1
      %p171 = por %p169, %p170
      %p172 = scmp.ne.s32.totalorder %s163, %s164
      %p173 = scmp.eq.s32.totalorder %s27, 0
      %p174 = por %p172, %p173
      %p175 = scmp.ne.s32.totalorder %s163, %s164
      %p176 = scmp.eq.s32.totalorder %s28, 1
      %p177 = por %p175, %p176
      %p179 = scmp.ne.s32.totalorder %s164, %s178
      %p180 = scmp.eq.s32.totalorder %s28, 0
      %p181 = por %p179, %p180
      %s183 = sadd.s32 %s182, 1
      %p186 = scmp.eq.s32.totalorder %s22, 1
      %p187 = scmp.ne.s32.totalorder %s182, %s184
      %p188 = scmp.eq.s32.totalorder %s22, 0
      %p189 = por %p187, %p188
      %p190 = scmp.ne.s32.totalorder %s182, %s184
      %p191 = scmp.eq.s32.totalorder %s27, 1
      %p192 = por %p190, %p191
      %p193 = scmp.ne.s32.totalorder %s184, %s185
      %p194 = scmp.eq.s32.totalorder %s27, 0
      %p195 = por %p193, %p194
      %p196 = scmp.ne.s32.totalorder %s184, %s185
      %p197 = scmp.eq.s32.totalorder %s28, 1
      %p198 = por %p196, %p197
      %p200 = scmp.ne.s32.totalorder %s185, %s199
      %p201 = scmp.eq.s32.totalorder %s28, 0
      %p202 = por %p200, %p201
      %s203 = ssub.s32 %s22, %s29
      %p204 = scmp.eq.s32.totalorder %s203, 0
      %s206 = sadd.s32 %s205, 1
      %s207 = scalar_select %p204, %s205, %s206
      %p210 = pneg %p204
      %p211 = scmp.eq.s32.totalorder %s22, 1
      %p212 = por %p210, %p211
      %p213 = scmp.ne.s32.totalorder %s205, %s208
      %p214 = scmp.eq.s32.totalorder %s22, 0
      %p215 = por %p213, %p214
      %p216 = scmp.ne.s32.totalorder %s205, %s208
      %p217 = scmp.eq.s32.totalorder %s27, 1
      %p218 = por %p216, %p217
      %p219 = scmp.ne.s32.totalorder %s208, %s209
      %p220 = scmp.eq.s32.totalorder %s27, 0
      %p221 = por %p219, %p220
      %p222 = scmp.ne.s32.totalorder %s208, %s209
      %p223 = scmp.eq.s32.totalorder %s28, 1
      %p224 = por %p222, %p223
      %p226 = scmp.ne.s32.totalorder %s209, %s225
      %p227 = scmp.eq.s32.totalorder %s28, 0
      %p228 = por %p226, %p227
      %p229 = scmp.le.s32.totalorder 1, %s22
      %p230 = scmp.lt.s32.totalorder %s22, 3
      %p231 = pnand %p229, %p230
      %p232 = pneg %p231
      // Predicated region
      $region9: #{tpu_custom_call.1} parent=5 // pred_check
        _
      $region10: #{tpu_custom_call.1} parent=5 // pred_check_branch
        %234 = sbr.rel (%p231) target = $region12
      $region11: #{tpu_custom_call.1} parent=5 // pred_region
        %s235 = ssub.s32 %s22, 1
        // Predicated region
        $region13: #{tpu_custom_call.1} parent=11 // pred_check
          %p236 = pneg %p69
        $region14: #{tpu_custom_call.1} parent=11 // pred_check_branch
          %238 = sbr.rel (%p236) target = $region16
        $region15: #{tpu_custom_call.1} parent=11 // pred_region
          %s240 = ssub.s32 768, 768
          %241 = vsyncadd [#allocation6], %s240
          %s242 = sshll.u32 [#allocation5], 4
          %s243 = int_to_ptr.vmem [resolvable:$true] %s242
          %248 = dma.hbm_to_vmem [thread:$0]  %s1, 768, %s243, [#allocation6], 256, 256, 16
        $region16: #{tpu_custom_call.1} parent=11 // pred_fallthru
          _
        // Predicated region
        $region17: #{tpu_custom_call.1} parent=11 // pred_check
          %p249 = pneg %p90
        $region18: #{tpu_custom_call.1} parent=11 // pred_check_branch
          %251 = sbr.rel (%p249) target = $region20
        $region19: #{tpu_custom_call.1} parent=11 // pred_region
          _
        $region20: #{tpu_custom_call.1} parent=11 // pred_fallthru
          _
        // Predicated region
        $region21: #{tpu_custom_call.1} parent=11 // pred_check
          %p252 = pneg %p111
        $region22: #{tpu_custom_call.1} parent=11 // pred_check_branch
          %254 = sbr.rel (%p252) target = $region24
        $region23: #{tpu_custom_call.1} parent=11 // pred_region
          _
        $region24: #{tpu_custom_call.1} parent=11 // pred_fallthru
          _
        // Predicated region
        $region25: #{tpu_custom_call.1} parent=11 // pred_check
          %p255 = pneg %p132
        $region26: #{tpu_custom_call.1} parent=11 // pred_check_branch
          %257 = sbr.rel (%p255) target = $region28
        $region27: #{tpu_custom_call.1} parent=11 // pred_region
          %s259 = ssub.s32 128, 128
          %260 = vsyncadd [#allocation6], %s259
          %s262 = sshll.u32 [#allocation7], 4
          %s263 = int_to_ptr.vmem [resolvable:$true] %s262
          %265 = dma.hbm_to_vmem [thread:$0]  %s4, 128, %s263, [#allocation6]
        $region28: #{tpu_custom_call.1} parent=11 // pred_fallthru
          _
        // Predicated region
        $region29: #{tpu_custom_call.1} parent=11 // pred_check
          %p266 = pneg %p153
        $region30: #{tpu_custom_call.1} parent=11 // pred_check_branch
          %268 = sbr.rel (%p266) target = $region32
        $region31: #{tpu_custom_call.1} parent=11 // pred_region
          %s270 = ssub.s32 128, 128
          %271 = vsyncadd [#allocation9], %s270
          %s273 = sshll.u32 [#allocation8], 4
          %s274 = int_to_ptr.vmem [resolvable:$true] %s273
          %276 = dma.hbm_to_vmem [thread:$0]  %s5, 128, %s274, [#allocation9]
        $region32: #{tpu_custom_call.1} parent=11 // pred_fallthru
          _
        // Predicated region
        $region33: #{tpu_custom_call.1} parent=11 // pred_check
          %p277 = pneg %p174
        $region34: #{tpu_custom_call.1} parent=11 // pred_check_branch
          %279 = sbr.rel (%p277) target = $region36
        $region35: #{tpu_custom_call.1} parent=11 // pred_region
          %s281 = ssub.s32 128, 128
          %282 = vsyncadd [#allocation9], %s281
          %s284 = sshll.u32 [#allocation10], 4
          %s285 = int_to_ptr.vmem [resolvable:$true] %s284
          %287 = dma.hbm_to_vmem [thread:$0]  %s6, 128, %s285, [#allocation9]
        $region36: #{tpu_custom_call.1} parent=11 // pred_fallthru
          _
        // Predicated region
        $region37: #{tpu_custom_call.1} parent=11 // pred_check
          %p288 = pneg %p195
        $region38: #{tpu_custom_call.1} parent=11 // pred_check_branch
          %290 = sbr.rel (%p288) target = $region40
        $region39: #{tpu_custom_call.1} parent=11 // pred_region
          _
        $region40: #{tpu_custom_call.1} parent=11 // pred_fallthru
          _
      $region12: #{tpu_custom_call.1} parent=5 // pred_fallthru
        _
      %p291 = scmp.lt.s32.totalorder %s22, 2
      // Predicated region
      $region41: #{tpu_custom_call.1} parent=5 // pred_check
        %p292 = pneg %p291
      $region42: #{tpu_custom_call.1} parent=5 // pred_check_branch
        %294 = sbr.rel (%p292) target = $region44
      $region43: #{tpu_custom_call.1} parent=5 // pred_region
        // Predicated region
        $region45: #{tpu_custom_call.1} parent=43 // pred_check
          %p295 = pneg %p42
        $region46: #{tpu_custom_call.1} parent=43 // pred_check_branch
          %297 = sbr.rel (%p295) target = $region48
        $region47: #{tpu_custom_call.1} parent=43 // pred_region
          %s298 = sand.u32 %s32, 1
          %s299 = scalar_lea.sflag [#allocation3], %s298
          %s300 = sand.u32 %s32, 1
          %s301 = smul.addr %s300, 16
          %s302 = scalar_lea.vmem [#allocation2], %s301
          %s303 = smul.u32 2, %s22
          %s305 = ssub.s32 256, 256
          %306 = vsyncadd %s299, %s305
          %s307 = smul.addr %s303, 128
          %s308 = scalar_lea.hbm %s0, %s307
          %s310 = sshll.u32 %s302, 4
          %s311 = int_to_ptr.vmem [resolvable:$true] %s310
          %313 = dma.hbm_to_vmem [thread:$0]  %s308, 256, %s311, %s299
        $region48: #{tpu_custom_call.1} parent=43 // pred_fallthru
          _
      $region44: #{tpu_custom_call.1} parent=5 // pred_fallthru
        _
      %p314 = scmp.le.s32.totalorder 1, %s22
      %p315 = scmp.lt.s32.totalorder %s22, 3
      %p316 = pnand %p314, %p315
      %p317 = pneg %p316
      // Predicated region
      $region49: #{tpu_custom_call.1} parent=5 // pred_check
        _
      $region50: #{tpu_custom_call.1} parent=5 // pred_check_branch
        %319 = sbr.rel (%p316) target = $region52
      $region51: #{tpu_custom_call.1} parent=5 // pred_region
        %s320 = ssub.s32 %s22, 1
        %s321 = sand.u32 %s35, 1
        %s322 = scalar_lea.sflag [#allocation3], %s321
        %s323 = sand.u32 %s35, 1
        %s324 = smul.addr %s323, 16
        %s325 = scalar_lea.vmem [#allocation2], %s324
        // Predicated region
        $region53: #{tpu_custom_call.1} parent=51 // pred_check
          %p326 = pneg %p48
        $region54: #{tpu_custom_call.1} parent=51 // pred_check_branch
          %328 = sbr.rel (%p326) target = $region56
        $region55: #{tpu_custom_call.1} parent=51 // pred_region
          %329 = dma.done %s322, 256
        $region56: #{tpu_custom_call.1} parent=51 // pred_fallthru
          _
        // Predicated region
        $region57: #{tpu_custom_call.1} parent=51 // pred_check
          %p330 = pneg %p69
        $region58: #{tpu_custom_call.1} parent=51 // pred_check_branch
          %332 = sbr.rel (%p330) target = $region60
        $region59: #{tpu_custom_call.1} parent=51 // pred_region
          %333 = dma.done [#allocation6], 768
        $region60: #{tpu_custom_call.1} parent=51 // pred_fallthru
          _
        // Predicated region
        $region61: #{tpu_custom_call.1} parent=51 // pred_check
          %p334 = pneg %p132
        $region62: #{tpu_custom_call.1} parent=51 // pred_check_branch
          %336 = sbr.rel (%p334) target = $region64
        $region63: #{tpu_custom_call.1} parent=51 // pred_region
          %337 = dma.done [#allocation6], 128
        $region64: #{tpu_custom_call.1} parent=51 // pred_fallthru
          _
        // Predicated region
        $region65: #{tpu_custom_call.1} parent=51 // pred_check
          %p338 = pneg %p153
        $region66: #{tpu_custom_call.1} parent=51 // pred_check_branch
          %340 = sbr.rel (%p338) target = $region68
        $region67: #{tpu_custom_call.1} parent=51 // pred_region
          %341 = dma.done [#allocation9], 128
        $region68: #{tpu_custom_call.1} parent=51 // pred_fallthru
          _
        // Predicated region
        $region69: #{tpu_custom_call.1} parent=51 // pred_check
          %p342 = pneg %p174
        $region70: #{tpu_custom_call.1} parent=51 // pred_check_branch
          %344 = sbr.rel (%p342) target = $region72
        $region71: #{tpu_custom_call.1} parent=51 // pred_region
          %345 = dma.done [#allocation9], 128
        $region72: #{tpu_custom_call.1} parent=51 // pred_fallthru
          _
        %s346 = sand.u32 %s35, 1
        %s347 = scalar_lea.sflag [#allocation3], %s346
        %s348 = sand.u32 %s35, 1
        %s349 = smul.addr %s348, 16
        %s350 = scalar_lea.vmem [#allocation2], %s349
        %p351 = pneg %p48
        %p352 = pneg %p45
        %p353 = pneg %p69
        %p354 = pneg %p66
        %p355 = pneg %p90
        %p356 = pneg %p87
        %p357 = pneg %p111
        %p358 = pneg %p108
        %p359 = pneg %p132
        %p360 = pneg %p129
        %p361 = pneg %p153
        %p362 = pneg %p150
        %p363 = pneg %p174
        %p364 = pneg %p171
        %p365 = pneg %p195
        %p366 = pneg %p192
        %p367 = pneg %p221
        %p368 = pneg %p218
        %s369 = sand.u32 %s208, 1
        %s370 = scalar_lea.sflag [#allocation4], %s369
        %s371 = sand.u32 %s208, 1
        %s372 = smul.addr %s371, 16
        %s373 = scalar_lea.vmem [#allocation11], %s372
        %s374 = smul.u32 2, %s27
        %s375 = smul.u32 2, %s27
        %v376 = vld [vmem:[%s325] sm:$0xff]
        %v377 = vld [vmem:[%s325 + $0x8] sm:$0xff]
        %v378 = vld [vmem:[#allocation5] sm:$0xff]
        %v379 = vld [vmem:[#allocation5 + $0x8] sm:$0xff]
        %v380 = vld [vmem:[#allocation5 + $0x10] sm:$0xff]
        %v381 = vld [vmem:[#allocation5 + $0x18] sm:$0xff]
        %v382 = vld [vmem:[#allocation5 + $0x20] sm:$0x3]
        %v383 = vld [vmem:[#allocation5 + $0x28] sm:$0x3]
        %v384 = vld [vmem:[%s2] sm:$0xff]
        %386 = vset.pattern.permute.xlu0 4
        %387 = vperm.xlu0 %386, %v384
        %v388 = vpop.permute.xlu0 %387
        %v390 = vmul.f32 %v388, %v376
        %v391 = vmul.f32 %v388, %v377
        %392 = vrot.lane.b32.xlu0 %v376, 17
        %v393 = vpop.permute.xlu0 %392
        %394 = vrot.lane.b32.xlu0 %v377, 17
        %v395 = vpop.permute.xlu0 %394
        %v396 = vlaneseq
        %v397 = vand.u32 %v396, 127
        %vm398 = vcmp.lt.s32.totalorder %v397, 17
        %v399 = vsel %vm398, %v393, %v395
        %v400 = vsel %vm398, %v395, %v393
        %v401 = vlaneseq
        %v402 = vshrl.u32 %v401, 7
        %v403 = vsub.s32 0, %v402
        %v404 = vrot.slane %v378, %v403
        %v405 = vlaneseq
        %v406 = vshrl.u32 %v405, 7
        %v407 = vsub.s32 0, %v406
        %v408 = vrot.slane %v379, %v407
        %v409 = vmul.f32 %v400, %v404
        %v410 = vmul.f32 %v399, %v408
        %411 = vset.pattern.permute.xlu0 0
        %412 = vperm.xlu0 %411, %v384
        %v413 = vpop.permute.xlu0 %412
        %v415 = vmul.f32 %v413, %v409
        %v416 = vmul.f32 %v413, %v410
        %v417 = vadd.f32 %v390, %v415
        %v418 = vadd.f32 %v391, %v416
        %419 = vrot.lane.b32.xlu0 %v376, 16
        %v420 = vpop.permute.xlu0 %419
        %421 = vrot.lane.b32.xlu0 %v377, 16
        %v422 = vpop.permute.xlu0 %421
        %vm423 = vcmp.lt.s32.totalorder %v397, 16
        %v424 = vsel %vm423, %v420, %v422
        %v425 = vsel %vm423, %v422, %v420
        %v426 = vlaneseq
        %v427 = vshrl.u32 %v426, 7
        %v428 = vsub.s32 1, %v427
        %v429 = vrot.slane %v378, %v428
        %v430 = vlaneseq
        %v431 = vshrl.u32 %v430, 7
        %v432 = vsub.s32 1, %v431
        %v433 = vrot.slane %v379, %v432
        %v434 = vmul.f32 %v425, %v429
        %v435 = vmul.f32 %v424, %v433
        %436 = vset.pattern.permute.xlu0 1
        %437 = vperm.xlu0 %436, %v384
        %v438 = vpop.permute.xlu0 %437
        %v440 = vmul.f32 %v438, %v434
        %v441 = vmul.f32 %v438, %v435
        %v442 = vadd.f32 %v417, %v440
        %v443 = vadd.f32 %v418, %v441
        %444 = vrot.lane.b32.xlu0 %v376, 15
        %v445 = vpop.permute.xlu0 %444
        %446 = vrot.lane.b32.xlu0 %v377, 15
        %v447 = vpop.permute.xlu0 %446
        %vm448 = vcmp.lt.s32.totalorder %v397, 15
        %v449 = vsel %vm448, %v445, %v447
        %v450 = vsel %vm448, %v447, %v445
        %v451 = vlaneseq
        %v452 = vshrl.u32 %v451, 7
        %v453 = vsub.s32 2, %v452
        %v454 = vrot.slane %v378, %v453
        %v455 = vlaneseq
        %v456 = vshrl.u32 %v455, 7
        %v457 = vsub.s32 2, %v456
        %v458 = vrot.slane %v379, %v457
        %v459 = vmul.f32 %v450, %v454
        %v460 = vmul.f32 %v449, %v458
        %461 = vset.pattern.permute.xlu0 2
        %462 = vperm.xlu0 %461, %v384
        %v463 = vpop.permute.xlu0 %462
        %v465 = vmul.f32 %v463, %v459
        %v466 = vmul.f32 %v463, %v460
        %v467 = vadd.f32 %v442, %v465
        %v468 = vadd.f32 %v443, %v466
        %469 = vrot.lane.b32.xlu0 %v376, 1
        %v470 = vpop.permute.xlu0 %469
        %471 = vrot.lane.b32.xlu0 %v377, 1
        %v472 = vpop.permute.xlu0 %471
        %vm473 = vcmp.lt.s32.totalorder %v397, 1
        %v474 = vsel %vm473, %v470, %v472
        %v475 = vsel %vm473, %v472, %v470
        %v476 = vlaneseq
        %v477 = vshrl.u32 %v476, 7
        %v478 = vsub.s32 3, %v477
        %v479 = vrot.slane %v378, %v478
        %v480 = vlaneseq
        %v481 = vshrl.u32 %v480, 7
        %v482 = vsub.s32 3, %v481
        %v483 = vrot.slane %v379, %v482
        %v484 = vmul.f32 %v475, %v479
        %v485 = vmul.f32 %v474, %v483
        %486 = vset.pattern.permute.xlu0 3
        %487 = vperm.xlu0 %486, %v384
        %v488 = vpop.permute.xlu0 %487
        %v490 = vmul.f32 %v488, %v484
        %v491 = vmul.f32 %v488, %v485
        %v492 = vadd.f32 %v467, %v490
        %v493 = vadd.f32 %v468, %v491
        %494 = vrot.lane.b32.xlu0 %v376, 127
        %v495 = vpop.permute.xlu0 %494
        %496 = vrot.lane.b32.xlu0 %v377, 127
        %v497 = vpop.permute.xlu0 %496
        %vm498 = vcmp.lt.s32.totalorder %v397, 127
        %v499 = vsel %vm498, %v495, %v497
        %v500 = vsel %vm498, %v497, %v495
        %v501 = vlaneseq
        %v502 = vshrl.u32 %v501, 7
        %v503 = vsub.s32 5, %v502
        %v504 = vrot.slane %v378, %v503
        %v505 = vlaneseq
        %v506 = vshrl.u32 %v505, 7
        %v507 = vsub.s32 5, %v506
        %v508 = vrot.slane %v379, %v507
        %v509 = vmul.f32 %v499, %v504
        %v510 = vmul.f32 %v500, %v508
        %511 = vset.pattern.permute.xlu0 5
        %512 = vperm.xlu0 %511, %v384
        %v513 = vpop.permute.xlu0 %512
        %v515 = vmul.f32 %v513, %v509
        %v516 = vmul.f32 %v513, %v510
        %v517 = vadd.f32 %v492, %v515
        %v518 = vadd.f32 %v493, %v516
        %519 = vrot.lane.b32.xlu0 %v376, 113
        %v520 = vpop.permute.xlu0 %519
        %521 = vrot.lane.b32.xlu0 %v377, 113
        %v522 = vpop.permute.xlu0 %521
        %vm523 = vcmp.lt.s32.totalorder %v397, 113
        %v524 = vsel %vm523, %v520, %v522
        %v525 = vsel %vm523, %v522, %v520
        %v526 = vlaneseq
        %v527 = vshrl.u32 %v526, 7
        %v528 = vsub.s32 6, %v527
        %v529 = vrot.slane %v378, %v528
        %v530 = vlaneseq
        %v531 = vshrl.u32 %v530, 7
        %v532 = vsub.s32 6, %v531
        %v533 = vrot.slane %v379, %v532
        %v534 = vmul.f32 %v524, %v529
        %v535 = vmul.f32 %v525, %v533
        %536 = vset.pattern.permute.xlu0 6
        %537 = vperm.xlu0 %536, %v384
        %v538 = vpop.permute.xlu0 %537
        %v540 = vmul.f32 %v538, %v534
        %v541 = vmul.f32 %v538, %v535
        %v542 = vadd.f32 %v517, %v540
        %v543 = vadd.f32 %v518, %v541
        %544 = vrot.lane.b32.xlu0 %v376, 112
        %v545 = vpop.permute.xlu0 %544
        %546 = vrot.lane.b32.xlu0 %v377, 112
        %v547 = vpop.permute.xlu0 %546
        %vm548 = vcmp.lt.s32.totalorder %v397, 112
        %v549 = vsel %vm548, %v545, %v547
        %v550 = vsel %vm548, %v547, %v545
        %v551 = vlaneseq
        %v552 = vshrl.u32 %v551, 7
        %v553 = vsub.s32 7, %v552
        %v554 = vrot.slane %v378, %v553
        %v555 = vlaneseq
        %v556 = vshrl.u32 %v555, 7
        %v557 = vsub.s32 7, %v556
        %v558 = vrot.slane %v379, %v557
        %v559 = vmul.f32 %v549, %v554
        %v560 = vmul.f32 %v550, %v558
        %561 = vset.pattern.permute.xlu0 7
        %562 = vperm.xlu0 %561, %v384
        %v563 = vpop.permute.xlu0 %562
        %v565 = vmul.f32 %v563, %v559
        %v566 = vmul.f32 %v563, %v560
        %v567 = vadd.f32 %v542, %v565
        %v568 = vadd.f32 %v543, %v566
        %569 = vrot.lane.b32.xlu0 %v376, 111
        %v570 = vpop.permute.xlu0 %569
        %571 = vrot.lane.b32.xlu0 %v377, 111
        %v572 = vpop.permute.xlu0 %571
        %vm573 = vcmp.lt.s32.totalorder %v397, 111
        %v574 = vsel %vm573, %v570, %v572
        %v575 = vsel %vm573, %v572, %v570
        %v576 = vlaneseq
        %v577 = vshrl.u32 %v576, 7
        %v578 = vsub.s32 0, %v577
        %v579 = vrot.slane %v380, %v578
        %v580 = vlaneseq
        %v581 = vshrl.u32 %v580, 7
        %v582 = vsub.s32 0, %v581
        %v583 = vrot.slane %v381, %v582
        %v584 = vmul.f32 %v574, %v579
        %v585 = vmul.f32 %v575, %v583
        %586 = vset.pattern.permute.xlu0 8
        %587 = vperm.xlu0 %586, %v384
        %v588 = vpop.permute.xlu0 %587
        %v590 = vmul.f32 %v588, %v584
        %v591 = vmul.f32 %v588, %v585
        %v592 = vadd.f32 %v567, %v590
        %v593 = vadd.f32 %v568, %v591
        %v594 = vld [vmem:[#allocation7] sm:$0xff]
        %v595 = vld [vmem:[%s7] sm:$0xff]
        %597 = vset.pattern.permute.xlu0 0
        %598 = vperm.xlu0 %597, %v595
        %v599 = vpop.permute.xlu0 %598
        %vm601 = vcmask 64512
        %v603 = vsel %vm601, %v594, 0
        %605 = vmatprep.subr.mxu0 0.0
        %606 = vmatpush1.msra.mxu0 0.0
        %607 = vmatprep.subr.mxu0 0.0
        %608 = vmatpush1.msra.mxu0 0.0
        %609 = vmatprep.subr.mxu0 0.0
        %610 = vmatpush1.msra.mxu0 0.0
        %611 = vmatprep.subr.mxu0 0.0
        %612 = vmatpush1.msra.mxu0 0.0
        %613 = vmatprep.subr.mxu0 0.0
        %614 = vmatpush1.msra.mxu0 0.0
        %615 = vmatprep.subr.mxu0 0.0
        %616 = vmatpush1.msra.mxu0 0.0
        %617 = vmatprep.subr.mxu0 0.0
        %618 = vmatpush1.msra.mxu0 0.0
        %619 = vmatprep.subr.mxu0 0.0
        %620 = vmatpush1.msra.mxu0 0.0
        %621 = vmatprep.subr.mxu0 0.0
        %622 = vmatpush1.msra.mxu0 0.0
        %623 = vmatprep.subr.mxu0 0.0
        %624 = vmatpush1.msra.mxu0 0.0
        %625 = vmatprep.subr.mxu0 0.0
        %626 = vmatpush1.msra.mxu0 0.0
        %627 = vmatprep.subr.mxu0 0.0
        %628 = vmatpush1.msra.mxu0 0.0
        %629 = vmatprep.subr.mxu0 0.0
        %630 = vmatpush1.msra.mxu0 0.0
        %631 = vmatprep.subr.mxu0 0.0
        %632 = vmatpush1.msra.mxu0 0.0
        %633 = vmatprep.subr.mxu0 0.0
        %634 = vmatpush1.msra.mxu0 0.0
        %635 = vmatprep.subr.mxu0 %v593
        %636 = vmatpush1.msra.mxu0 %v592
        %637 = vmatprep.subr.mxu0 0.0
        %638 = vmatpush2.msra.mxu0 0.0
        %639 = vmatprep.subr.mxu0 0.0
        %640 = vmatpush2.msra.mxu0 0.0
        %641 = vmatprep.subr.mxu0 0.0
        %642 = vmatpush2.msra.mxu0 0.0
        %643 = vmatprep.subr.mxu0 0.0
        %644 = vmatpush2.msra.mxu0 0.0
        %645 = vmatprep.subr.mxu0 0.0
        %646 = vmatpush2.msra.mxu0 0.0
        %647 = vmatprep.subr.mxu0 0.0
        %648 = vmatpush2.msra.mxu0 0.0
        %649 = vmatprep.subr.mxu0 0.0
        %650 = vmatpush2.msra.mxu0 0.0
        %651 = vmatprep.subr.mxu0 0.0
        %652 = vmatpush2.msra.mxu0 0.0
        %653 = vmatprep.subr.mxu0 0.0
        %654 = vmatpush2.msra.mxu0 0.0
        %655 = vmatprep.subr.mxu0 0.0
        %656 = vmatpush2.msra.mxu0 0.0
        %657 = vmatprep.subr.mxu0 0.0
        %658 = vmatpush2.msra.mxu0 0.0
        %659 = vmatprep.subr.mxu0 0.0
        %660 = vmatpush2.msra.mxu0 0.0
        %661 = vmatprep.subr.mxu0 0.0
        %662 = vmatpush2.msra.mxu0 0.0
        %663 = vmatprep.subr.mxu0 0.0
        %664 = vmatpush2.msra.mxu0 0.0
        %665 = vmatprep.subr.mxu0 0.0
        %666 = vmatpush2.msra.mxu0 0.0
        %667 = vmatprep.subr.mxu0 0.0
        %668 = vmatpush2.msra.mxu0 0.0
        %669 = vmatprep.mubr.f32.mxu0 0.0
        %670 = vmatmul.mubr.f32.gmra.mxu0 %v603
        %v671 = vpop.f32.mrf.mxu0
        %v672 = vadd.f32 %v599, %v671
        %v673 = vpop.f32.mrf.mxu0
        %v674 = vadd.f32 %v599, %v673
        %675 = vdwg.mxu0
        %v676 = vmax.f32 %v672, 0.0
        %v677 = vmax.f32 %v674, 0.0
        %v678 = vld [vmem:[%s3] sm:$0xff]
        %680 = vset.pattern.permute.xlu0 4
        %681 = vperm.xlu0 %680, %v678
        %v682 = vpop.permute.xlu0 %681
        %v684 = vmul.f32 %v682, %v676
        %v685 = vmul.f32 %v682, %v677
        %686 = vrot.lane.b32.xlu0 %v676, 51
        %v687 = vpop.permute.xlu0 %686
        %688 = vrot.lane.b32.xlu0 %v677, 51
        %v689 = vpop.permute.xlu0 %688
        %vm690 = vcmp.lt.s32.totalorder %v397, 51
        %v691 = vsel %vm690, %v687, %v689
        %v692 = vsel %vm690, %v689, %v687
        %v693 = vlaneseq
        %v694 = vshrl.u32 %v693, 7
        %v695 = vsub.s32 1, %v694
        %v696 = vrot.slane %v380, %v695
        %v697 = vlaneseq
        %v698 = vshrl.u32 %v697, 7
        %v699 = vsub.s32 1, %v698
        %v700 = vrot.slane %v381, %v699
        %v701 = vmul.f32 %v692, %v696
        %v702 = vmul.f32 %v691, %v700
        %703 = vset.pattern.permute.xlu0 0
        %704 = vperm.xlu0 %703, %v678
        %v705 = vpop.permute.xlu0 %704
        %v707 = vmul.f32 %v705, %v701
        %v708 = vmul.f32 %v705, %v702
        %v709 = vadd.f32 %v684, %v707
        %v710 = vadd.f32 %v685, %v708
        %711 = vrot.lane.b32.xlu0 %v676, 48
        %v712 = vpop.permute.xlu0 %711
        %713 = vrot.lane.b32.xlu0 %v677, 48
        %v714 = vpop.permute.xlu0 %713
        %vm715 = vcmp.lt.s32.totalorder %v397, 48
        %v716 = vsel %vm715, %v712, %v714
        %v717 = vsel %vm715, %v714, %v712
        %v718 = vlaneseq
        %v719 = vshrl.u32 %v718, 7
        %v720 = vsub.s32 2, %v719
        %v721 = vrot.slane %v380, %v720
        %v722 = vlaneseq
        %v723 = vshrl.u32 %v722, 7
        %v724 = vsub.s32 2, %v723
        %v725 = vrot.slane %v381, %v724
        %v726 = vmul.f32 %v717, %v721
        %v727 = vmul.f32 %v716, %v725
        %728 = vset.pattern.permute.xlu0 1
        %729 = vperm.xlu0 %728, %v678
        %v730 = vpop.permute.xlu0 %729
        %v732 = vmul.f32 %v730, %v726
        %v733 = vmul.f32 %v730, %v727
        %v734 = vadd.f32 %v709, %v732
        %v735 = vadd.f32 %v710, %v733
        %736 = vrot.lane.b32.xlu0 %v676, 45
        %v737 = vpop.permute.xlu0 %736
        %738 = vrot.lane.b32.xlu0 %v677, 45
        %v739 = vpop.permute.xlu0 %738
        %vm740 = vcmp.lt.s32.totalorder %v397, 45
        %v741 = vsel %vm740, %v737, %v739
        %v742 = vsel %vm740, %v739, %v737
        %v743 = vlaneseq
        %v744 = vshrl.u32 %v743, 7
        %v745 = vsub.s32 3, %v744
        %v746 = vrot.slane %v380, %v745
        %v747 = vlaneseq
        %v748 = vshrl.u32 %v747, 7
        %v749 = vsub.s32 3, %v748
        %v750 = vrot.slane %v381, %v749
        %v751 = vmul.f32 %v742, %v746
        %v752 = vmul.f32 %v741, %v750
        %753 = vset.pattern.permute.xlu0 2
        %754 = vperm.xlu0 %753, %v678
        %v755 = vpop.permute.xlu0 %754
        %v757 = vmul.f32 %v755, %v751
        %v758 = vmul.f32 %v755, %v752
        %v759 = vadd.f32 %v734, %v757
        %v760 = vadd.f32 %v735, %v758
        %761 = vrot.lane.b32.xlu0 %v676, 3
        %v762 = vpop.permute.xlu0 %761
        %763 = vrot.lane.b32.xlu0 %v677, 3
        %v764 = vpop.permute.xlu0 %763
        %vm765 = vcmp.lt.s32.totalorder %v397, 3
        %v766 = vsel %vm765, %v762, %v764
        %v767 = vsel %vm765, %v764, %v762
        %v768 = vlaneseq
        %v769 = vshrl.u32 %v768, 7
        %v770 = vsub.s32 4, %v769
        %v771 = vrot.slane %v380, %v770
        %v772 = vlaneseq
        %v773 = vshrl.u32 %v772, 7
        %v774 = vsub.s32 4, %v773
        %v775 = vrot.slane %v381, %v774
        %v776 = vmul.f32 %v767, %v771
        %v777 = vmul.f32 %v766, %v775
        %778 = vset.pattern.permute.xlu0 3
        %779 = vperm.xlu0 %778, %v678
        %v780 = vpop.permute.xlu0 %779
        %v782 = vmul.f32 %v780, %v776
        %v783 = vmul.f32 %v780, %v777
        %v784 = vadd.f32 %v759, %v782
        %v785 = vadd.f32 %v760, %v783
        %786 = vrot.lane.b32.xlu0 %v676, 125
        %v787 = vpop.permute.xlu0 %786
        %788 = vrot.lane.b32.xlu0 %v677, 125
        %v789 = vpop.permute.xlu0 %788
        %vm790 = vcmp.lt.s32.totalorder %v397, 125
        %v791 = vsel %vm790, %v787, %v789
        %v792 = vsel %vm790, %v789, %v787
        %v793 = vlaneseq
        %v794 = vshrl.u32 %v793, 7
        %v795 = vsub.s32 6, %v794
        %v796 = vrot.slane %v380, %v795
        %v797 = vlaneseq
        %v798 = vshrl.u32 %v797, 7
        %v799 = vsub.s32 6, %v798
        %v800 = vrot.slane %v381, %v799
        %v801 = vmul.f32 %v791, %v796
        %v802 = vmul.f32 %v792, %v800
        %803 = vset.pattern.permute.xlu0 5
        %804 = vperm.xlu0 %803, %v678
        %v805 = vpop.permute.xlu0 %804
        %v807 = vmul.f32 %v805, %v801
        %v808 = vmul.f32 %v805, %v802
        %v809 = vadd.f32 %v784, %v807
        %v810 = vadd.f32 %v785, %v808
        %811 = vrot.lane.b32.xlu0 %v676, 83
        %v812 = vpop.permute.xlu0 %811
        %813 = vrot.lane.b32.xlu0 %v677, 83
        %v814 = vpop.permute.xlu0 %813
        %vm815 = vcmp.lt.s32.totalorder %v397, 83
        %v816 = vsel %vm815, %v812, %v814
        %v817 = vsel %vm815, %v814, %v812
        %v818 = vlaneseq
        %v819 = vshrl.u32 %v818, 7
        %v820 = vsub.s32 7, %v819
        %v821 = vrot.slane %v380, %v820
        %v822 = vlaneseq
        %v823 = vshrl.u32 %v822, 7
        %v824 = vsub.s32 7, %v823
        %v825 = vrot.slane %v381, %v824
        %v826 = vmul.f32 %v816, %v821
        %v827 = vmul.f32 %v817, %v825
        %828 = vset.pattern.permute.xlu0 6
        %829 = vperm.xlu0 %828, %v678
        %v830 = vpop.permute.xlu0 %829
        %v832 = vmul.f32 %v830, %v826
        %v833 = vmul.f32 %v830, %v827
        %v834 = vadd.f32 %v809, %v832
        %v835 = vadd.f32 %v810, %v833
        %836 = vrot.lane.b32.xlu0 %v676, 80
        %v837 = vpop.permute.xlu0 %836
        %838 = vrot.lane.b32.xlu0 %v677, 80
        %v839 = vpop.permute.xlu0 %838
        %vm840 = vcmp.lt.s32.totalorder %v397, 80
        %v841 = vsel %vm840, %v837, %v839
        %v842 = vsel %vm840, %v839, %v837
        %v843 = vlaneseq
        %v844 = vshrl.u32 %v843, 7
        %v845 = vsub.s32 0, %v844
        %v846 = vrot.slane %v382, %v845
        %v847 = vlaneseq
        %v848 = vshrl.u32 %v847, 7
        %v849 = vsub.s32 0, %v848
        %v850 = vrot.slane %v383, %v849
        %v851 = vmul.f32 %v841, %v846
        %v852 = vmul.f32 %v842, %v850
        %853 = vset.pattern.permute.xlu0 7
        %854 = vperm.xlu0 %853, %v678
        %v855 = vpop.permute.xlu0 %854
        %v857 = vmul.f32 %v855, %v851
        %v858 = vmul.f32 %v855, %v852
        %v859 = vadd.f32 %v834, %v857
        %v860 = vadd.f32 %v835, %v858
        %861 = vrot.lane.b32.xlu0 %v676, 77
        %v862 = vpop.permute.xlu0 %861
        %863 = vrot.lane.b32.xlu0 %v677, 77
        %v864 = vpop.permute.xlu0 %863
        %vm865 = vcmp.lt.s32.totalorder %v397, 77
        %v866 = vsel %vm865, %v862, %v864
        %v867 = vsel %vm865, %v864, %v862
        %v868 = vlaneseq
        %v869 = vshrl.u32 %v868, 7
        %v870 = vsub.s32 1, %v869
        %v871 = vrot.slane %v382, %v870
        %v872 = vlaneseq
        %v873 = vshrl.u32 %v872, 7
        %v874 = vsub.s32 1, %v873
        %v875 = vrot.slane %v383, %v874
        %v876 = vmul.f32 %v866, %v871
        %v877 = vmul.f32 %v867, %v875
        %878 = vset.pattern.permute.xlu0 8
        %879 = vperm.xlu0 %878, %v678
        %v880 = vpop.permute.xlu0 %879
        %v882 = vmul.f32 %v880, %v876
        %v883 = vmul.f32 %v880, %v877
        %v884 = vadd.f32 %v859, %v882
        %v885 = vadd.f32 %v860, %v883
        %v886 = vld [vmem:[#allocation8] sm:$0xff]
        %887 = vset.pattern.permute.xlu0 1
        %888 = vperm.xlu0 %887, %v595
        %v889 = vpop.permute.xlu0 %888
        %v892 = vsel %vm601, %v886, 0
        %894 = vmatprep.subr.mxu0 0.0
        %895 = vmatpush1.msra.mxu0 0.0
        %896 = vmatprep.subr.mxu0 0.0
        %897 = vmatpush1.msra.mxu0 0.0
        %898 = vmatprep.subr.mxu0 0.0
        %899 = vmatpush1.msra.mxu0 0.0
        %900 = vmatprep.subr.mxu0 0.0
        %901 = vmatpush1.msra.mxu0 0.0
        %902 = vmatprep.subr.mxu0 0.0
        %903 = vmatpush1.msra.mxu0 0.0
        %904 = vmatprep.subr.mxu0 0.0
        %905 = vmatpush1.msra.mxu0 0.0
        %906 = vmatprep.subr.mxu0 0.0
        %907 = vmatpush1.msra.mxu0 0.0
        %908 = vmatprep.subr.mxu0 0.0
        %909 = vmatpush1.msra.mxu0 0.0
        %910 = vmatprep.subr.mxu0 0.0
        %911 = vmatpush1.msra.mxu0 0.0
        %912 = vmatprep.subr.mxu0 0.0
        %913 = vmatpush1.msra.mxu0 0.0
        %914 = vmatprep.subr.mxu0 0.0
        %915 = vmatpush1.msra.mxu0 0.0
        %916 = vmatprep.subr.mxu0 0.0
        %917 = vmatpush1.msra.mxu0 0.0
        %918 = vmatprep.subr.mxu0 0.0
        %919 = vmatpush1.msra.mxu0 0.0
        %920 = vmatprep.subr.mxu0 0.0
        %921 = vmatpush1.msra.mxu0 0.0
        %922 = vmatprep.subr.mxu0 0.0
        %923 = vmatpush1.msra.mxu0 0.0
        %924 = vmatprep.subr.mxu0 %v885
        %925 = vmatpush1.msra.mxu0 %v884
        %926 = vmatprep.subr.mxu0 0.0
        %927 = vmatpush2.msra.mxu0 0.0
        %928 = vmatprep.subr.mxu0 0.0
        %929 = vmatpush2.msra.mxu0 0.0
        %930 = vmatprep.subr.mxu0 0.0
        %931 = vmatpush2.msra.mxu0 0.0
        %932 = vmatprep.subr.mxu0 0.0
        %933 = vmatpush2.msra.mxu0 0.0
        %934 = vmatprep.subr.mxu0 0.0
        %935 = vmatpush2.msra.mxu0 0.0
        %936 = vmatprep.subr.mxu0 0.0
        %937 = vmatpush2.msra.mxu0 0.0
        %938 = vmatprep.subr.mxu0 0.0
        %939 = vmatpush2.msra.mxu0 0.0
        %940 = vmatprep.subr.mxu0 0.0
        %941 = vmatpush2.msra.mxu0 0.0
        %942 = vmatprep.subr.mxu0 0.0
        %943 = vmatpush2.msra.mxu0 0.0
        %944 = vmatprep.subr.mxu0 0.0
        %945 = vmatpush2.msra.mxu0 0.0
        %946 = vmatprep.subr.mxu0 0.0
        %947 = vmatpush2.msra.mxu0 0.0
        %948 = vmatprep.subr.mxu0 0.0
        %949 = vmatpush2.msra.mxu0 0.0
        %950 = vmatprep.subr.mxu0 0.0
        %951 = vmatpush2.msra.mxu0 0.0
        %952 = vmatprep.subr.mxu0 0.0
        %953 = vmatpush2.msra.mxu0 0.0
        %954 = vmatprep.subr.mxu0 0.0
        %955 = vmatpush2.msra.mxu0 0.0
        %956 = vmatprep.subr.mxu0 0.0
        %957 = vmatpush2.msra.mxu0 0.0
        %958 = vmatprep.mubr.f32.mxu0 0.0
        %959 = vmatmul.mubr.f32.gmra.mxu0 %v892
        %v960 = vpop.f32.mrf.mxu0
        %v961 = vadd.f32 %v889, %v960
        %v962 = vpop.f32.mrf.mxu0
        %v963 = vadd.f32 %v889, %v962
        %964 = vdwg.mxu0
        %v965 = vmax.f32 %v961, 0.0
        %v966 = vmax.f32 %v963, 0.0
        %v967 = vld [vmem:[#allocation10] sm:$0xff]
        %968 = vset.pattern.permute.xlu0 2
        %969 = vperm.xlu0 %968, %v595
        %v970 = vpop.permute.xlu0 %969
        %v973 = vsel %vm601, %v967, 0
        %975 = vmatprep.subr.mxu0 0.0
        %976 = vmatpush1.msra.mxu0 0.0
        %977 = vmatprep.subr.mxu0 0.0
        %978 = vmatpush1.msra.mxu0 0.0
        %979 = vmatprep.subr.mxu0 0.0
        %980 = vmatpush1.msra.mxu0 0.0
        %981 = vmatprep.subr.mxu0 0.0
        %982 = vmatpush1.msra.mxu0 0.0
        %983 = vmatprep.subr.mxu0 0.0
        %984 = vmatpush1.msra.mxu0 0.0
        %985 = vmatprep.subr.mxu0 0.0
        %986 = vmatpush1.msra.mxu0 0.0
        %987 = vmatprep.subr.mxu0 0.0
        %988 = vmatpush1.msra.mxu0 0.0
        %989 = vmatprep.subr.mxu0 0.0
        %990 = vmatpush1.msra.mxu0 0.0
        %991 = vmatprep.subr.mxu0 0.0
        %992 = vmatpush1.msra.mxu0 0.0
        %993 = vmatprep.subr.mxu0 0.0
        %994 = vmatpush1.msra.mxu0 0.0
        %995 = vmatprep.subr.mxu0 0.0
        %996 = vmatpush1.msra.mxu0 0.0
        %997 = vmatprep.subr.mxu0 0.0
        %998 = vmatpush1.msra.mxu0 0.0
        %999 = vmatprep.subr.mxu0 0.0
        %1000 = vmatpush1.msra.mxu0 0.0
        %1001 = vmatprep.subr.mxu0 0.0
        %1002 = vmatpush1.msra.mxu0 0.0
        %1003 = vmatprep.subr.mxu0 0.0
        %1004 = vmatpush1.msra.mxu0 0.0
        %1005 = vmatprep.subr.mxu0 %v966
        %1006 = vmatpush1.msra.mxu0 %v965
        %1007 = vmatprep.subr.mxu0 0.0
        %1008 = vmatpush2.msra.mxu0 0.0
        %1009 = vmatprep.subr.mxu0 0.0
        %1010 = vmatpush2.msra.mxu0 0.0
        %1011 = vmatprep.subr.mxu0 0.0
        %1012 = vmatpush2.msra.mxu0 0.0
        %1013 = vmatprep.subr.mxu0 0.0
        %1014 = vmatpush2.msra.mxu0 0.0
        %1015 = vmatprep.subr.mxu0 0.0
        %1016 = vmatpush2.msra.mxu0 0.0
        %1017 = vmatprep.subr.mxu0 0.0
        %1018 = vmatpush2.msra.mxu0 0.0
        %1019 = vmatprep.subr.mxu0 0.0
        %1020 = vmatpush2.msra.mxu0 0.0
        %1021 = vmatprep.subr.mxu0 0.0
        %1022 = vmatpush2.msra.mxu0 0.0
        %1023 = vmatprep.subr.mxu0 0.0
        %1024 = vmatpush2.msra.mxu0 0.0
        %1025 = vmatprep.subr.mxu0 0.0
        %1026 = vmatpush2.msra.mxu0 0.0
        %1027 = vmatprep.subr.mxu0 0.0
        %1028 = vmatpush2.msra.mxu0 0.0
        %1029 = vmatprep.subr.mxu0 0.0
        %1030 = vmatpush2.msra.mxu0 0.0
        %1031 = vmatprep.subr.mxu0 0.0
        %1032 = vmatpush2.msra.mxu0 0.0
        %1033 = vmatprep.subr.mxu0 0.0
        %1034 = vmatpush2.msra.mxu0 0.0
        %1035 = vmatprep.subr.mxu0 0.0
        %1036 = vmatpush2.msra.mxu0 0.0
        %1037 = vmatprep.subr.mxu0 0.0
        %1038 = vmatpush2.msra.mxu0 0.0
        %1039 = vmatprep.mubr.f32.mxu0 0.0
        %1040 = vmatmul.mubr.f32.gmra.mxu0 %v973
        %v1041 = vpop.f32.mrf.mxu0
        %v1042 = vadd.f32 %v970, %v1041
        %v1043 = vpop.f32.mrf.mxu0
        %v1044 = vadd.f32 %v970, %v1043
        %1045 = vdwg.mxu0
        %1046 = vst [vmem:[%s373] sm:$0xff] %v1042
        %1047 = vst [vmem:[%s373 + $0x8] sm:$0xff] %v1044
        %s1048 = sand.u32 %s208, 1
        %s1049 = scalar_lea.sflag [#allocation4], %s1048
        %s1050 = sand.u32 %s208, 1
        %s1051 = smul.addr %s1050, 16
        %s1052 = scalar_lea.vmem [#allocation11], %s1051
        // Predicated region
        $region73: #{tpu_custom_call.1} parent=51 // pred_check
          %p1053 = pneg %p218
        $region74: #{tpu_custom_call.1} parent=51 // pred_check_branch
          %1055 = sbr.rel (%p1053) target = $region76
        $region75: #{tpu_custom_call.1} parent=51 // pred_region
          %s1056 = smul.u32 2, %s27
          %s1058 = ssub.s32 256, 256
          %1059 = vsyncadd %s1049, %s1058
          %s1060 = smul.addr %s1056, 128
          %s1061 = scalar_lea.hbm %s8, %s1060
          %s1063 = sshll.u32 %s1052, 4
          %s1064 = int_to_ptr.vmem [resolvable:$true] %s1063
          %1066 = dma.vmem_to_hbm [thread:$0]  %s1064, 256, %s1061, %s1049
        $region76: #{tpu_custom_call.1} parent=51 // pred_fallthru
          _
      $region52: #{tpu_custom_call.1} parent=5 // pred_fallthru
        _
      %p1067 = scmp.le.s32.totalorder 2, %s22
      // Predicated region
      $region77: #{tpu_custom_call.1} parent=5 // pred_check
        %p1068 = pneg %p1067
      $region78: #{tpu_custom_call.1} parent=5 // pred_check_branch
        %1070 = sbr.rel (%p1068) target = $region80
      $region79: #{tpu_custom_call.1} parent=5 // pred_region
        %s1071 = ssub.s32 %s22, 2
        // Predicated region
        $region81: #{tpu_custom_call.1} parent=79 // pred_check
          %p1072 = pneg %p224
        $region82: #{tpu_custom_call.1} parent=79 // pred_check_branch
          %1074 = sbr.rel (%p1072) target = $region84
        $region83: #{tpu_custom_call.1} parent=79 // pred_region
          %s1075 = sand.u32 %s209, 1
          %s1076 = scalar_lea.sflag [#allocation4], %s1075
          %s1077 = sand.u32 %s209, 1
          %s1078 = smul.addr %s1077, 16
          %s1079 = scalar_lea.vmem [#allocation11], %s1078
          %1080 = dma.done %s1076, 256
        $region84: #{tpu_custom_call.1} parent=79 // pred_fallthru
          _
      $region80: #{tpu_custom_call.1} parent=5 // pred_fallthru
        _
    $region6: #{tpu_custom_call.1} parent=1 // loop_footer
      %s26 = sadd.s32 1, %s22
    $region7: #{tpu_custom_call.1} parent=1 // loop_footer_branch
      %21 = sbr.rel target = $region3
    $region8: #{tpu_custom_call.1} parent=1 // loop_exit
      _
    %1081 = vsyncpa [#allocation3], 1
    %s1082 = scalar_lea.sflag [#allocation3], 1
    %1083 = vsyncpa %s1082, 1
    %1084 = vsyncpa [#allocation6], 1
    %1085 = vsyncpa [#allocation9], 1
    %1086 = vsyncpa [#allocation4], 1
    %s1087 = scalar_lea.sflag [#allocation4], 1
    %1088 = vsyncpa %s1087, 1

</llo_original>
